<compile_context>
chip_gen: v7x
topology: tpu7x:2x2x1
jax: 0.10.0
libtpu: 0.0.40
codegen_flags: <defaults>
</compile_context>

<pallas_src>
import functools

import jax
import jax.numpy as jnp
from jax.experimental import pallas as pl
from jax.experimental.pallas import tpu as pltpu

LANES = 128
ALIGN_ROWS = 16                 # keeps sublane alignment valid for bf16 too
MAX_BLOCK_ROWS = 8192           # 8192 x 128 f32 = 4 MiB per input buffer
MIN_GRID_STEPS = 4              # feed both v7x TCs + give the pipeline depth
VMEM_LIMIT_BYTES = 40 << 20     # 16 MiB of input double-buffers + headroom;
                                # < 64 MiB physical on v7x, < 128 MiB elsewhere


def _round_up(n, m):
    return ((n + m - 1) // m) * m


def _focal_loss_kernel(x_ref, t_ref, out_ref, *, pos_weight, gamma, logits):
    x = x_ref[...].astype(jnp.float32)
    t = t_ref[...].astype(jnp.float32)

    if logits:
        # numerically-stable BCE-with-logits: max(x,0) - x*t + log1p(exp(-|x|))
        bce = jnp.maximum(x, 0.0) - x * t + jnp.log1p(jnp.exp(-jnp.abs(x)))
    else:
        # PyTorch F.binary_cross_entropy clamps the log terms at -100
        log_p = jnp.maximum(jnp.log(x), -100.0)
        log_1mp = jnp.maximum(jnp.log(1.0 - x), -100.0)
        bce = -(t * log_p + (1.0 - t) * log_1mp)

    pt = jnp.exp(-bce)
    one_minus_pt = 1.0 - pt

    # Integer-exponent fast path (default gamma=2 -> a single VPU multiply,
    # avoiding pow's exp(gamma*log(.)) on the EUP).
    g = float(gamma)
    if g == int(g) and 0 <= int(g) <= 8:
        gi = int(g)
        if gi == 0:
            mod = jnp.ones_like(one_minus_pt)
        else:
            mod = one_minus_pt
            for _ in range(gi - 1):
                mod = mod * one_minus_pt
    else:
        mod = one_minus_pt ** g

    f_loss = mod * bce
    if float(pos_weight) != 1.0:
        f_loss = float(pos_weight) * f_loss

    # No tail mask: the wrapper pads to whole blocks with zero-loss values.
    # Vreg-wise partial sum: (block_rows, 128) -> (1, 8, 128), pure VPU adds.
    out_ref[...] = jnp.sum(f_loss.reshape(1, -1, 8, LANES), axis=1)


def focal_loss(inputs, targets, *, pos_weight=1.0, gamma=2.0,
               logits=False, reduce=True):
    """Pallas TPU focal loss. Returns the scalar mean (reduce=True)."""
    if not reduce:
        # TODO(synk): reduce=False (per-element loss map) path not implemented;
        # the default module config (reduce=True) is what the kernel targets.
        raise NotImplementedError("reduce=False not implemented")

    orig_n = int(inputs.size)

    flat_x = inputs.reshape(-1)
    flat_t = targets.reshape(-1)

    # Pick a block size that (a) gives at least ~MIN_GRID_STEPS grid steps for
    # megacore/pipeline depth, (b) caps at MAX_BLOCK_ROWS, (c) stays a multiple
    # of ALIGN_ROWS for sublane alignment.
    rows0 = _round_up(-(-orig_n // LANES), ALIGN_ROWS)
    block_rows = min(MAX_BLOCK_ROWS,
                     _round_up(-(-rows0 // MIN_GRID_STEPS), ALIGN_ROWS))
    n_blocks = -(-rows0 // block_rows)
    rows = n_blocks * block_rows
    padded_n = rows * LANES

    # Pad to a whole number of blocks with values whose focal loss is exactly
    # zero, so no in-kernel masking is needed and no block reads OOB:
    #   logits=False: x=0, t=0 -> bce=0 (clamped logs), (1-pt)=0 -> loss 0
    #   logits=True : x=-100, t=0 -> bce=0 -> loss 0
    pad = padded_n - orig_n
    if pad:
        x_pad_val = -100.0 if logits else 0.0
        flat_x = jnp.pad(flat_x, (0, pad), constant_values=x_pad_val)
        flat_t = jnp.pad(flat_t, (0, pad), constant_values=0.0)

    x2 = flat_x.reshape(rows, LANES)
    t2 = flat_t.reshape(rows, LANES)

    kernel = functools.partial(
        _focal_loss_kernel,
        pos_weight=float(pos_weight),
        gamma=float(gamma),
        logits=bool(logits),
    )

    partials = pl.pallas_call(
        kernel,
        out_shape=jax.ShapeDtypeStruct((n_blocks, 8, LANES), jnp.float32),
        grid_spec=pltpu.PrefetchScalarGridSpec(
            num_scalar_prefetch=0,
            grid=(n_blocks,),
            in_specs=[
                pl.BlockSpec((block_rows, LANES), lambda i: (i, 0)),
                pl.BlockSpec((block_rows, LANES), lambda i: (i, 0)),
            ],
            out_specs=pl.BlockSpec((1, 8, LANES), lambda i: (i, 0, 0)),
        ),
        compiler_params=pltpu.CompilerParams(
            dimension_semantics=("parallel",),
            vmem_limit_bytes=VMEM_LIMIT_BYTES,
        ),
    )(x2, t2)

    # Tiny XLA reduce of the (n_blocks, 8, 128) partials -> scalar mean.
    return jnp.sum(partials) / orig_n


def focal_loss_ref(inputs, targets, *, pos_weight=1.0, gamma=2.0, logits=False):
    x = inputs.astype(jnp.float32)
    t = targets.astype(jnp.float32)
    if logits:
        bce = jnp.maximum(x, 0.0) - x * t + jnp.log1p(jnp.exp(-jnp.abs(x)))
    else:
        bce = -(t * jnp.maximum(jnp.log(x), -100.0)
                + (1.0 - t) * jnp.maximum(jnp.log(1.0 - x), -100.0))
    pt = jnp.exp(-bce)
    return jnp.mean(pos_weight * (1.0 - pt) ** gamma * bce)


if __name__ == "__main__":
    key = jax.random.PRNGKey(0)
    k1, k2, k3, k4 = jax.random.split(key, 4)

    # small shapes consistent with a multi-label image task: (B, C, H, W)
    shape = (2, 4, 16, 16)
    # logits=False in the default module -> inputs must be probabilities
    probs = jax.nn.sigmoid(jax.random.normal(k1, shape, dtype=jnp.float32))
    targets = (jax.random.uniform(k2, shape) > 0.5).astype(jnp.float32)

    out = focal_loss(probs, targets, pos_weight=1.0, gamma=2.0,
                     logits=False, reduce=True)
    out = jax.block_until_ready(out)
    ref = focal_loss_ref(probs, targets, pos_weight=1.0, gamma=2.0, logits=False)
    assert jnp.allclose(out, ref, rtol=1e-5, atol=1e-6), (out, ref)

    # ragged size (exercises zero-loss padding) + logits=True path
    shape2 = (3, 5, 7, 11)
    logits_in = jax.random.normal(k3, shape2, dtype=jnp.float32)
    targets2 = (jax.random.uniform(k4, shape2) > 0.5).astype(jnp.float32)

    out2 = focal_loss(logits_in, targets2, pos_weight=1.0, gamma=2.0,
                      logits=True, reduce=True)
    out2 = jax.block_until_ready(out2)
    ref2 = focal_loss_ref(logits_in, targets2, pos_weight=1.0, gamma=2.0,
                          logits=True)
    assert jnp.allclose(out2, ref2, rtol=1e-5, atol=1e-6), (out2, ref2)

    print("KERNEL_OK")
</pallas_src>

<mosaic_0001>
module attributes {stable_mosaic.version = 11 : i64} {
  func.func @_focal_loss_kernel(%arg0: i32, %arg1: memref<16x128xf32, #tpu.memory_space<vmem>>, %arg2: memref<16x128xf32, #tpu.memory_space<vmem>>, %arg3: memref<1x8x128xf32, #tpu.memory_space<vmem>>) attributes {dimension_semantics = [#tpu.dimension_semantics<parallel>], iteration_bounds = array<i64: 1>, scalar_prefetch = 0 : i64, scratch_operands = 0 : i64, tpu.core_type = #tpu.core_type<tc>, window_params = [{transform_indices = @transform_0, window_bounds = array<i64: 16, 128>}, {transform_indices = @transform_1, window_bounds = array<i64: 16, 128>}, {transform_indices = @transform_2, window_bounds = array<i64: 1, 8, 128>}]} {
    %c0 = arith.constant 0 : index
    %c0_0 = arith.constant 0 : index
    %0 = vector.load %arg1[%c0, %c0_0] : memref<16x128xf32, #tpu.memory_space<vmem>>, vector<16x128xf32>
    %c0_1 = arith.constant 0 : index
    %c0_2 = arith.constant 0 : index
    %1 = vector.load %arg2[%c0_1, %c0_2] : memref<16x128xf32, #tpu.memory_space<vmem>>, vector<16x128xf32>
    %2 = math.log %0 : vector<16x128xf32>
    %cst = arith.constant -1.000000e+02 : f32
    %3 = vector.broadcast %cst : f32 to vector<16x128xf32>
    %4 = arith.maximumf %2, %3 : vector<16x128xf32>
    %cst_3 = arith.constant 1.000000e+00 : f32
    %5 = vector.broadcast %cst_3 : f32 to vector<16x128xf32>
    %6 = arith.subf %5, %0 : vector<16x128xf32>
    %7 = math.log %6 : vector<16x128xf32>
    %cst_4 = arith.constant -1.000000e+02 : f32
    %8 = vector.broadcast %cst_4 : f32 to vector<16x128xf32>
    %9 = arith.maximumf %7, %8 : vector<16x128xf32>
    %10 = arith.mulf %1, %4 : vector<16x128xf32>
    %cst_5 = arith.constant 1.000000e+00 : f32
    %11 = vector.broadcast %cst_5 : f32 to vector<16x128xf32>
    %12 = arith.subf %11, %1 : vector<16x128xf32>
    %13 = arith.mulf %12, %9 : vector<16x128xf32>
    %14 = arith.addf %10, %13 : vector<16x128xf32>
    %cst_6 = arith.constant 0.000000e+00 : f32
    %15 = vector.broadcast %cst_6 : f32 to vector<16x128xf32>
    %16 = arith.subf %15, %14 : vector<16x128xf32>
    %cst_7 = arith.constant 0.000000e+00 : f32
    %17 = vector.broadcast %cst_7 : f32 to vector<16x128xf32>
    %18 = arith.subf %17, %16 : vector<16x128xf32>
    %19 = math.exp %18 : vector<16x128xf32>
    %cst_8 = arith.constant 1.000000e+00 : f32
    %20 = vector.broadcast %cst_8 : f32 to vector<16x128xf32>
    %21 = arith.subf %20, %19 : vector<16x128xf32>
    %22 = arith.mulf %21, %21 : vector<16x128xf32>
    %23 = arith.mulf %22, %16 : vector<16x128xf32>
    %24 = vector.shape_cast %23 : vector<16x128xf32> to vector<1x2x8x128xf32>
    %cst_9 = arith.constant dense<0.000000e+00> : vector<1x8x128xf32>
    %25 = vector.multi_reduction <add>, %24, %cst_9 [1] : vector<1x2x8x128xf32> to vector<1x8x128xf32>
    %c0_10 = arith.constant 0 : index
    %c0_11 = arith.constant 0 : index
    %c0_12 = arith.constant 0 : index
    %26 = vector.load %arg3[%c0_10, %c0_11, %c0_12] : memref<1x8x128xf32, #tpu.memory_space<vmem>>, vector<1x8x128xf32>
    tpu.vector_store %arg3[%c0_10, %c0_11, %c0_12], %25 {strides = array<i32>} : memref<1x8x128xf32, #tpu.memory_space<vmem>>, vector<1x8x128xf32>,
    return
  }
  func.func @transform_0(%arg0: i32) -> (i32, i32) {
    %c0_i32 = arith.constant 0 : i32
    %c0_i32_0 = arith.constant 0 : i32
    return %arg0, %c0_i32 : i32, i32
  }
  func.func @transform_1(%arg0: i32) -> (i32, i32) {
    %c0_i32 = arith.constant 0 : i32
    %c0_i32_0 = arith.constant 0 : i32
    return %arg0, %c0_i32 : i32, i32
  }
  func.func @transform_2(%arg0: i32) -> (i32, i32, i32) {
    %c0_i32 = arith.constant 0 : i32
    %c0_i32_0 = arith.constant 0 : i32
    %c0_i32_1 = arith.constant 0 : i32
    return %arg0, %c0_i32, %c0_i32_0 : i32, i32, i32
  }
}

</mosaic_0001>

<llo_original>
// kernel: tpu_custom_call.1
$region0: #{tpu_custom_call.1}
  #allocation0 [shape = 'u32[]', space=smem, size = 0x4, offset = 0x4, fixed_abs, tag = 'smem constant byte address 0x4 - core index']
  #allocation1 [shape = 'u32[144,128]{1,0:T(1,128)}', space=vmem, size = 0x12000, scoped, tag = 'internal scratch']
  %s0 = inlined_call_operand.hbm [shape: f32[16,128], index: 0, kind: input, shape index: {}]
  %s1 = inlined_call_operand.hbm [shape: f32[16,128], index: 1, kind: input, shape index: {}]
  %s2 = inlined_call_operand.hbm [shape: f32[1,8,128], index: 2, kind: output, shape index: {}]
  %s3 = sld [smem:[#allocation0]]
  $region26: #{tpu_custom_call.1} parent=0
    _
  %s5 = ssub.s32 1, %s3
  %s6 = scalar_select 0, %s5, %s3
  $region1: #{tpu_custom_call.1} parent=0
    #allocation2 [shape = 'u8[8192]{0}', space=vmem, size = 0x2000, scoped, tag = 'input window, operand 0, single buffered']
    #allocation3 [shape = 's32[1]{0}', space=sflag, size = 0x4, scoped, tag = 'scoped memory for tpu_custom_call.1']
    #allocation4 [shape = 's32[1]{0}', space=sflag, size = 0x4, scoped, tag = 'scoped memory for tpu_custom_call.1']
    #allocation5 [shape = 'u8[8192]{0}', space=vmem, size = 0x2000, scoped, tag = 'input window, operand 1, single buffered']
    #allocation6 [shape = 's32[1]{0}', space=sflag, size = 0x4, scoped, tag = 'scoped memory for tpu_custom_call.1']
    #allocation7 [shape = 'u8[4096]{0}', space=vmem, size = 0x1000, scoped, tag = 'output window, operand 0, single buffered']
    %7 = vsyncpa [#allocation3], 0
    %8 = vsyncpa [#allocation6], 0
    %9 = vsyncpa [#allocation4], 0
    // Predicated region
    $region2: #{tpu_custom_call.1} parent=1 // pred_check
      _
    $region3: #{tpu_custom_call.1} parent=1 // pred_check_branch
      %11 = sbr.rel (0) target = $region5
    $region4: #{tpu_custom_call.1} parent=1 // pred_region
      %s13 = ssub.s32 256, 256
      %14 = vsyncadd [#allocation3], %s13
      %s15 = sshll.u32 [#allocation2], 4
      %s16 = int_to_ptr.vmem [resolvable:$true] %s15
      %21 = dma.hbm_to_vmem [thread:$0]  %s0, 256, %s16, [#allocation3], 128, 128, 8
    $region5: #{tpu_custom_call.1} parent=1 // pred_fallthru
      _
    // Predicated region
    $region6: #{tpu_custom_call.1} parent=1 // pred_check
      _
    $region7: #{tpu_custom_call.1} parent=1 // pred_check_branch
      %23 = sbr.rel (0) target = $region9
    $region8: #{tpu_custom_call.1} parent=1 // pred_region
      %s25 = ssub.s32 256, 256
      %26 = vsyncadd [#allocation6], %s25
      %s27 = sshll.u32 [#allocation5], 4
      %s28 = int_to_ptr.vmem [resolvable:$true] %s27
      %33 = dma.hbm_to_vmem [thread:$0]  %s1, 256, %s28, [#allocation6], 128, 128, 8
    $region9: #{tpu_custom_call.1} parent=1 // pred_fallthru
      _
    // Predicated region
    $region10: #{tpu_custom_call.1} parent=1 // pred_check
      _
    $region11: #{tpu_custom_call.1} parent=1 // pred_check_branch
      %35 = sbr.rel (0) target = $region13
    $region12: #{tpu_custom_call.1} parent=1 // pred_region
      %36 = dma.done [#allocation3], 256
    $region13: #{tpu_custom_call.1} parent=1 // pred_fallthru
      _
    // Predicated region
    $region14: #{tpu_custom_call.1} parent=1 // pred_check
      _
    $region15: #{tpu_custom_call.1} parent=1 // pred_check_branch
      %38 = sbr.rel (0) target = $region17
    $region16: #{tpu_custom_call.1} parent=1 // pred_region
      %39 = dma.done [#allocation6], 256
    $region17: #{tpu_custom_call.1} parent=1 // pred_fallthru
      _
    %v40 = vld [vmem:[#allocation2] sm:$0xff]
    %v41 = vld [vmem:[#allocation2 + $0x8] sm:$0xff]
    %v42 = vld [vmem:[#allocation5] sm:$0xff]
    %v43 = vld [vmem:[#allocation5 + $0x8] sm:$0xff]
    %v44 = vlog2.pop %v40
    %v45 = vmul.f32 %v44, 0.6931472
    %v46 = vlog2.pop %v41
    %v47 = vmul.f32 %v46, 0.6931472
    %v48 = vmax.f32 %v45, -100.0
    %v49 = vmax.f32 %v47, -100.0
    %v50 = vsub.f32 1.0, %v40
    %v51 = vsub.f32 1.0, %v41
    %v52 = vlog2.pop %v50
    %v53 = vmul.f32 %v52, 0.6931472
    %v54 = vlog2.pop %v51
    %v55 = vmul.f32 %v54, 0.6931472
    %v56 = vmax.f32 %v53, -100.0
    %v57 = vmax.f32 %v55, -100.0
    %v58 = vmul.f32 %v42, %v48
    %v59 = vmul.f32 %v43, %v49
    %v60 = vsub.f32 1.0, %v42
    %v61 = vsub.f32 1.0, %v43
    %v62 = vmul.f32 %v60, %v56
    %v63 = vmul.f32 %v61, %v57
    %v64 = vadd.f32 %v58, %v62
    %v65 = vadd.f32 %v59, %v63
    %v66 = vsub.f32 0.0, %v64
    %v67 = vsub.f32 0.0, %v65
    %v68 = vsub.f32 0.0, %v66
    %v69 = vsub.f32 0.0, %v67
    %v70 = vmul.f32 %v68, 1.442695
    %v71 = vpow.pop %v70
    %v72 = vmul.f32 %v69, 1.442695
    %v73 = vpow.pop %v72
    %v74 = vsub.f32 1.0, %v71
    %v75 = vsub.f32 1.0, %v73
    %v76 = vmul.f32 %v74, %v74
    %v77 = vmul.f32 %v75, %v75
    %v78 = vmul.f32 %v76, %v66
    %v79 = vmul.f32 %v77, %v67
    %v80 = vadd.f32 %v78, %v79
    %81 = vst [vmem:[#allocation7] sm:$0xff] %v80
    // Predicated region
    $region18: #{tpu_custom_call.1} parent=1 // pred_check
      _
    $region19: #{tpu_custom_call.1} parent=1 // pred_check_branch
      %83 = sbr.rel (0) target = $region21
    $region20: #{tpu_custom_call.1} parent=1 // pred_region
      %s85 = ssub.s32 128, 128
      %86 = vsyncadd [#allocation4], %s85
      %s88 = sshll.u32 [#allocation7], 4
      %s89 = int_to_ptr.vmem [resolvable:$true] %s88
      %91 = dma.vmem_to_hbm [thread:$0]  %s89, 128, %s2, [#allocation4]
    $region21: #{tpu_custom_call.1} parent=1 // pred_fallthru
      _
    // Predicated region
    $region22: #{tpu_custom_call.1} parent=1 // pred_check
      _
    $region23: #{tpu_custom_call.1} parent=1 // pred_check_branch
      %93 = sbr.rel (0) target = $region25
    $region24: #{tpu_custom_call.1} parent=1 // pred_region
      %94 = dma.done [#allocation4], 128
    $region25: #{tpu_custom_call.1} parent=1 // pred_fallthru
      _
    %95 = vsyncpa [#allocation3], 1
    %96 = vsyncpa [#allocation6], 1
    %97 = vsyncpa [#allocation4], 1

</llo_original>
